<compile_context>
chip_gen: v7x
topology: tpu7x:2x2x1
jax: 0.10.0
libtpu: 0.0.40
codegen_flags: <defaults>
</compile_context>

<pallas_src>
import jax
import jax.numpy as jnp
from jax.experimental import pallas as pl
from jax.experimental.pallas import tpu as pltpu

EPS = 1e-5  # nn.LayerNorm default


def fusion_mlp_kernel(
    x1_ref,    # (Bt*S, D1) f32
    x2_ref,    # (Bt*S, D2) f32
    wqT_ref,   # (D1, D2)   bf16
    wkvT_ref,  # (D2, 2*D2) bf16  (Wk^T | Wv^T)
    w11T_ref,  # (D2, indim) bf16
    w12T_ref,  # (indim, D2) bf16
    b_ref,     # (1, indim + D2) f32  (b11 | b12)
    ln_ref,    # (4, S, D2) f32  (gamma12, beta12, gamma13, beta13)
    out_ref,   # (Bt, S*D2) f32  lane-dense output slab
    *maybe_attn,  # optionally: (Bt, S*S) f32 attn slab
):
    attn_ref = maybe_attn[0] if maybe_attn else None

    bf16 = jnp.bfloat16
    f32 = jnp.float32

    Bt = out_ref.shape[0]
    BS, D1 = x1_ref.shape
    D2 = x2_ref.shape[1]
    S = BS // Bt
    indim = w11T_ref.shape[1]

    x1f = x1_ref[...]                         # (Bt*S, D1) f32
    x2f = x2_ref[...]                         # (Bt*S, D2) f32, kept f32 for residual/LN

    # --- q / fused k,v projections (bias-free), batch folded into the MXU M dim ---
    q = jnp.dot(x1f.astype(bf16), wqT_ref[...], preferred_element_type=f32)   # (Bt*S, D2)
    kv = jnp.dot(x2f.astype(bf16), wkvT_ref[...], preferred_element_type=f32)  # (Bt*S, 2*D2)

    q3 = q.astype(bf16).reshape(Bt, S, D2)
    k3 = kv[:, :D2].astype(bf16).reshape(Bt, S, D2)
    v3 = kv[:, D2:].astype(bf16).reshape(Bt, S, D2)

    # --- scaled dot-product attention, batched over Bt (no explicit k transpose) ---
    scale = 1.0 / (float(D2) ** 0.5)
    scores = jax.lax.dot_general(
        q3, k3, dimension_numbers=(((2,), (2,)), ((0,), (0,))),
        preferred_element_type=f32) * scale                     # (Bt, S, S) f32
    m = jnp.max(scores, axis=-1, keepdims=True)
    e = jnp.exp(scores - m)
    # NOTE: approx EUP reciprocal => attention rows sum to 1 only to ~1e-3.
    attn = e * pl.reciprocal(jnp.sum(e, axis=-1, keepdims=True), approx=True)
    if attn_ref is not None:
        attn_ref[...] = attn.reshape(Bt, S * S)

    output = jax.lax.dot_general(
        attn.astype(bf16), v3, dimension_numbers=(((2,), (1,)), ((0,), (0,))),
        preferred_element_type=f32)                              # (Bt, S, D2) f32

    # --- residual + flattened LayerNorm (single pass: sum & sum-of-squares) ---
    inv_n = 1.0 / float(S * D2)
    ln = ln_ref[...]                                             # (4, S, D2)
    g12, bt12, g13, bt13 = ln[0], ln[1], ln[2], ln[3]

    def flat_layernorm(y, gamma, beta):
        # LayerNorm over the flattened (S*D2) axis, per batch element; f32 stats.
        s = jnp.sum(jnp.sum(y, axis=2, keepdims=True), axis=1, keepdims=True)
        s2 = jnp.sum(jnp.sum(y * y, axis=2, keepdims=True), axis=1, keepdims=True)
        mean = s * inv_n
        var = s2 * inv_n - mean * mean
        return (y - mean) * jax.lax.rsqrt(var + EPS) * gamma + beta

    y = flat_layernorm(x2f.reshape(Bt, S, D2) + output, g12, bt12)   # (Bt, S, D2)

    # --- position-wise MLP: linear11 -> ReLU -> linear12 (batch folded into M) ---
    b = b_ref[...]
    b11 = b[:, :indim]
    b12 = b[:, indim:]
    yf = y.reshape(Bt * S, D2)
    h = jnp.dot(yf.astype(bf16), w11T_ref[...], preferred_element_type=f32) + b11
    h = jnp.maximum(h, 0.0)
    src = jnp.dot(h.astype(bf16), w12T_ref[...], preferred_element_type=f32) + b12

    # --- second residual + flattened LayerNorm ---
    y = flat_layernorm(y + src.reshape(Bt, S, D2), g13, bt13)

    out_ref[...] = y.reshape(Bt, S * D2)                         # lane-dense store


def _default_batch_tile(B, S):
    # Split the batch across >=2 grid steps when sublane alignment allows it:
    # shards work across both v7x TensorCores and lets BlockSpec pipelining overlap
    # the x1/x2 DMA of step i+1 with compute of step i.  For tiny B a single step
    # avoids the ~0.35us/step fixed overhead.
    half = B // 2
    if half >= 8 and half % 8 == 0 and (half * S) % 8 == 0:
        return half
    return B


def fusion_mlp(x1, x2, params, *, batch_tile=None, return_attn=True):
    B, S, D1 = x1.shape
    _, _, D2 = x2.shape
    indim = params["w11T"].shape[1]
    d_model = params["g12"].size
    assert d_model == S * D2, (
        "LayerNorm d_model must equal S * in_dim2 for the flattened-view LayerNorm")

    Bt = _default_batch_tile(B, S) if batch_tile is None else batch_tile
    assert B % Bt == 0
    assert Bt == B or (Bt % 8 == 0 and (Bt * S) % 8 == 0), "batch tile must be sublane-aligned"
    grid = (B // Bt,)

    bf16 = jnp.bfloat16
    f32 = jnp.float32

    # Pack / pre-cast parameters (in production this is done once at model load).
    wqT = params["wqT"].astype(bf16)                                           # (D1, D2)
    wkvT = jnp.concatenate([params["wkT"], params["wvT"]], axis=1).astype(bf16)  # (D2, 2*D2)
    w11T = params["w11T"].astype(bf16)                                         # (D2, indim)
    w12T = params["w12T"].astype(bf16)                                         # (indim, D2)
    b_cat = jnp.concatenate([params["b11"], params["b12"]], axis=1).astype(f32)  # (1, indim+D2)
    ln_stack = jnp.stack(
        [params["g12"].reshape(S, D2), params["bt12"].reshape(S, D2),
         params["g13"].reshape(S, D2), params["bt13"].reshape(S, D2)],
        axis=0).astype(f32)                                                    # (4, S, D2)

    # Free HBM reshapes: kernel consumes flat (B*S, D) inputs directly.
    x1f = x1.reshape(B * S, D1).astype(f32)
    x2f = x2.reshape(B * S, D2).astype(f32)

    if return_attn:
        out_shape = (jax.ShapeDtypeStruct((B, S * D2), f32),
                     jax.ShapeDtypeStruct((B, S * S), f32))
        out_specs = (pl.BlockSpec((Bt, S * D2), lambda b: (b, 0)),
                     pl.BlockSpec((Bt, S * S), lambda b: (b, 0)))
    else:
        out_shape = jax.ShapeDtypeStruct((B, S * D2), f32)
        out_specs = pl.BlockSpec((Bt, S * D2), lambda b: (b, 0))

    full = lambda shape: pl.BlockSpec(shape, lambda b: (0,) * len(shape))

    results = pl.pallas_call(
        fusion_mlp_kernel,
        out_shape=out_shape,
        grid_spec=pltpu.PrefetchScalarGridSpec(
            num_scalar_prefetch=0,
            grid=grid,
            in_specs=[
                pl.BlockSpec((Bt * S, D1), lambda b: (b, 0)),   # x1 (flat)
                pl.BlockSpec((Bt * S, D2), lambda b: (b, 0)),   # x2 (flat)
                full((D1, D2)),                                 # Wq^T
                full((D2, 2 * D2)),                             # Wk^T | Wv^T
                full((D2, indim)),                              # W11^T
                full((indim, D2)),                              # W12^T
                full((1, indim + D2)),                          # b11 | b12
                full((4, S, D2)),                               # gamma12, beta12, gamma13, beta13
            ],
            out_specs=out_specs,
        ),
        compiler_params=pltpu.CompilerParams(
            dimension_semantics=("parallel",),
            vmem_limit_bytes=64 * 1024 * 1024,
        ),
    )(x1f, x2f, wqT, wkvT, w11T, w12T, b_cat, ln_stack)

    if return_attn:
        out_flat, attn_flat = results
        return out_flat.reshape(B, S, D2), attn_flat.reshape(B, S, S)
    return results.reshape(B, S, D2), None


def fusion_mlp_ref(x1, x2, params):
    B, S, D2 = x2.shape
    q1 = x1 @ params["wqT"]
    k2 = x2 @ params["wkT"]
    v2 = x2 @ params["wvT"]
    attn = jax.nn.softmax(
        jnp.einsum("bqd,bkd->bqk", q1, k2) / jnp.sqrt(jnp.float32(D2)), axis=-1)
    y = x2 + jnp.einsum("bqk,bkd->bqd", attn, v2)

    def ln(flat, g, b):
        m = flat.mean(-1, keepdims=True)
        v = ((flat - m) ** 2).mean(-1, keepdims=True)
        return (flat - m) * jax.lax.rsqrt(v + EPS) * g + b

    y = ln(y.reshape(B, -1), params["g12"].reshape(-1),
           params["bt12"].reshape(-1)).reshape(B, S, D2)
    h = jnp.maximum(y @ params["w11T"] + params["b11"][0], 0.0)
    src = h @ params["w12T"] + params["b12"][0]
    y = y + src
    y = ln(y.reshape(B, -1), params["g13"].reshape(-1),
           params["bt13"].reshape(-1)).reshape(B, S, D2)
    return y, attn


if __name__ == "__main__":
    # Small shapes consistent with the module: d_model = S * in_dim2
    B, S = 2, 8
    in_dim1, in_dim2, indim = 16, 32, 24
    d_model = S * in_dim2  # 256

    key = jax.random.PRNGKey(0)
    ks = jax.random.split(key, 12)

    x1 = jax.random.normal(ks[0], (B, S, in_dim1), jnp.float32)
    x2 = jax.random.normal(ks[1], (B, S, in_dim2), jnp.float32)

    params = {
        # Linear weights stored already transposed (y = x @ W^T)
        "wqT": 0.1 * jax.random.normal(ks[2], (in_dim1, in_dim2), jnp.float32),
        "wkT": 0.1 * jax.random.normal(ks[3], (in_dim2, in_dim2), jnp.float32),
        "wvT": 0.1 * jax.random.normal(ks[4], (in_dim2, in_dim2), jnp.float32),
        "w11T": 0.1 * jax.random.normal(ks[5], (in_dim2, indim), jnp.float32),
        "b11": 0.1 * jax.random.normal(ks[6], (1, indim), jnp.float32),
        "w12T": 0.1 * jax.random.normal(ks[7], (indim, in_dim2), jnp.float32),
        "b12": 0.1 * jax.random.normal(ks[8], (1, in_dim2), jnp.float32),
        # LayerNorm(d_model) affine params, 1-D like the torch module
        "g12": 1.0 + 0.05 * jax.random.normal(ks[9], (d_model,), jnp.float32),
        "bt12": 0.05 * jax.random.normal(ks[10], (d_model,), jnp.float32),
        "g13": jnp.ones((d_model,), jnp.float32),
        "bt13": jnp.zeros((d_model,), jnp.float32),
    }

    out, attn = fusion_mlp(x1, x2, params)
    out, attn = jax.block_until_ready((out, attn))

    ref_out, ref_attn = fusion_mlp_ref(x1, x2, params)
    # Tolerances account for bf16 MXU operands (f32 accumulation) and the approx
    # EUP reciprocal in the softmax denominator.
    assert jnp.allclose(out, ref_out, atol=5e-2, rtol=5e-2), "output mismatch vs reference"
    assert jnp.allclose(attn, ref_attn, atol=2e-2, rtol=2e-2), "attn mismatch vs reference"

    print("KERNEL_OK")
</pallas_src>

<mosaic_0001>
module attributes {stable_mosaic.version = 11 : i64} {
  func.func @fusion_mlp_kernel(%arg0: i32, %arg1: memref<16x16xf32, #tpu.memory_space<vmem>>, %arg2: memref<16x32xf32, #tpu.memory_space<vmem>>, %arg3: memref<16x32xbf16, #tpu.memory_space<vmem>>, %arg4: memref<32x64xbf16, #tpu.memory_space<vmem>>, %arg5: memref<32x24xbf16, #tpu.memory_space<vmem>>, %arg6: memref<24x32xbf16, #tpu.memory_space<vmem>>, %arg7: memref<1x56xf32, #tpu.memory_space<vmem>>, %arg8: memref<4x8x32xf32, #tpu.memory_space<vmem>>, %arg9: memref<2x256xf32, #tpu.memory_space<vmem>>, %arg10: memref<2x64xf32, #tpu.memory_space<vmem>>) attributes {dimension_semantics = [#tpu.dimension_semantics<parallel>], iteration_bounds = array<i64: 1>, scalar_prefetch = 0 : i64, scratch_operands = 0 : i64, tpu.core_type = #tpu.core_type<tc>, window_params = [{transform_indices = @transform_0, window_bounds = array<i64: 16, 16>}, {transform_indices = @transform_1, window_bounds = array<i64: 16, 32>}, {pipeline_mode = #tpu.pipeline_mode<synchronous>, transform_indices = @transform_2, window_bounds = array<i64: 16, 32>}, {pipeline_mode = #tpu.pipeline_mode<synchronous>, transform_indices = @transform_3, window_bounds = array<i64: 32, 64>}, {pipeline_mode = #tpu.pipeline_mode<synchronous>, transform_indices = @transform_4, window_bounds = array<i64: 32, 24>}, {pipeline_mode = #tpu.pipeline_mode<synchronous>, transform_indices = @transform_5, window_bounds = array<i64: 24, 32>}, {pipeline_mode = #tpu.pipeline_mode<synchronous>, transform_indices = @transform_6, window_bounds = array<i64: 1, 56>}, {pipeline_mode = #tpu.pipeline_mode<synchronous>, transform_indices = @transform_7, window_bounds = array<i64: 4, 8, 32>}, {transform_indices = @transform_8, window_bounds = array<i64: 2, 256>}, {transform_indices = @transform_9, window_bounds = array<i64: 2, 64>}]} {
    %c0 = arith.constant 0 : index
    %c0_0 = arith.constant 0 : index
    %0 = vector.load %arg1[%c0, %c0_0] : memref<16x16xf32, #tpu.memory_space<vmem>>, vector<16x16xf32>
    %c0_1 = arith.constant 0 : index
    %c0_2 = arith.constant 0 : index
    %1 = vector.load %arg2[%c0_1, %c0_2] : memref<16x32xf32, #tpu.memory_space<vmem>>, vector<16x32xf32>
    %2 = arith.truncf %0 : vector<16x16xf32> to vector<16x16xbf16>
    %c0_3 = arith.constant 0 : index
    %c0_4 = arith.constant 0 : index
    %3 = vector.load %arg3[%c0_3, %c0_4] : memref<16x32xbf16, #tpu.memory_space<vmem>>, vector<16x32xbf16>
    %cst = arith.constant dense<0.000000e+00> : vector<16x32xf32>
    %4 = tpu.matmul %2, %3, %cst {dimension_numbers = #tpu.dot_dimension_numbers<[1], [0], [0], [1], [0, 0, 1, 1], [], []>} : vector<16x16xbf16>, vector<16x32xbf16>, vector<16x32xf32> -> vector<16x32xf32>
    %5 = arith.truncf %1 : vector<16x32xf32> to vector<16x32xbf16>
    %c0_5 = arith.constant 0 : index
    %c0_6 = arith.constant 0 : index
    %6 = vector.load %arg4[%c0_5, %c0_6] : memref<32x64xbf16, #tpu.memory_space<vmem>>, vector<32x64xbf16>
    %cst_7 = arith.constant dense<0.000000e+00> : vector<16x64xf32>
    %7 = tpu.matmul %5, %6, %cst_7 {dimension_numbers = #tpu.dot_dimension_numbers<[1], [0], [0], [1], [0, 0, 1, 1], [], []>} : vector<16x32xbf16>, vector<32x64xbf16>, vector<16x64xf32> -> vector<16x64xf32>
    %8 = arith.truncf %4 : vector<16x32xf32> to vector<16x32xbf16>
    %9 = vector.shape_cast %8 : vector<16x32xbf16> to vector<2x8x32xbf16>
    %10 = vector.extract_strided_slice %7 {offsets = [0, 0], sizes = [16, 32], strides = [1, 1]} : vector<16x64xf32> to vector<16x32xf32>
    %11 = arith.truncf %10 : vector<16x32xf32> to vector<16x32xbf16>
    %12 = vector.shape_cast %11 : vector<16x32xbf16> to vector<2x8x32xbf16>
    %13 = vector.extract_strided_slice %7 {offsets = [0, 32], sizes = [16, 32], strides = [1, 1]} : vector<16x64xf32> to vector<16x32xf32>
    %14 = arith.truncf %13 : vector<16x32xf32> to vector<16x32xbf16>
    %15 = vector.shape_cast %14 : vector<16x32xbf16> to vector<2x8x32xbf16>
    %cst_8 = arith.constant dense<0.000000e+00> : vector<2x8x8xf32>
    %16 = tpu.matmul %9, %12, %cst_8 {dimension_numbers = #tpu.dot_dimension_numbers<[2], [2], [1], [1], [0, 0, 0, 1, 1, 1], [0], [0]>} : vector<2x8x32xbf16>, vector<2x8x32xbf16>, vector<2x8x8xf32> -> vector<2x8x8xf32>
    %cst_9 = arith.constant 0.176776692 : f32
    %17 = vector.broadcast %cst_9 : f32 to vector<2x8x8xf32>
    %18 = arith.mulf %16, %17 : vector<2x8x8xf32>
    %cst_10 = arith.constant dense<0xFF800000> : vector<2x8xf32>
    %19 = vector.multi_reduction <maximumf>, %18, %cst_10 [2] : vector<2x8x8xf32> to vector<2x8xf32>
    %20 = vector.shape_cast %19 : vector<2x8xf32> to vector<2x8x1xf32>
    %21 = vector.broadcast %20 : vector<2x8x1xf32> to vector<2x8x8xf32>
    %22 = arith.subf %18, %21 : vector<2x8x8xf32>
    %23 = math.exp %22 : vector<2x8x8xf32>
    %cst_11 = arith.constant dense<0.000000e+00> : vector<2x8xf32>
    %24 = vector.multi_reduction <add>, %23, %cst_11 [2] : vector<2x8x8xf32> to vector<2x8xf32>
    %25 = vector.shape_cast %24 : vector<2x8xf32> to vector<2x8x1xf32>
    %26 = tpu.reciprocal %25 {approx = true} : vector<2x8x1xf32> -> vector<2x8x1xf32>
    %27 = vector.broadcast %26 : vector<2x8x1xf32> to vector<2x8x8xf32>
    %28 = arith.mulf %23, %27 : vector<2x8x8xf32>
    %29 = vector.shape_cast %28 : vector<2x8x8xf32> to vector<2x64xf32>
    %c0_12 = arith.constant 0 : index
    %c0_13 = arith.constant 0 : index
    %30 = vector.load %arg10[%c0_12, %c0_13] : memref<2x64xf32, #tpu.memory_space<vmem>>, vector<2x64xf32>
    tpu.vector_store %arg10[%c0_12, %c0_13], %29 {strides = array<i32>} : memref<2x64xf32, #tpu.memory_space<vmem>>, vector<2x64xf32>,
    %31 = arith.truncf %28 : vector<2x8x8xf32> to vector<2x8x8xbf16>
    %cst_14 = arith.constant dense<0.000000e+00> : vector<2x8x32xf32>
    %32 = tpu.matmul %31, %15, %cst_14 {dimension_numbers = #tpu.dot_dimension_numbers<[2], [1], [1], [2], [0, 0, 0, 1, 1, 2], [0], [0]>} : vector<2x8x8xbf16>, vector<2x8x32xbf16>, vector<2x8x32xf32> -> vector<2x8x32xf32>
    %c0_15 = arith.constant 0 : index
    %c0_16 = arith.constant 0 : index
    %c0_17 = arith.constant 0 : index
    %33 = vector.load %arg8[%c0_15, %c0_16, %c0_17] : memref<4x8x32xf32, #tpu.memory_space<vmem>>, vector<4x8x32xf32>
    %34 = vector.extract_strided_slice %33 {offsets = [0, 0, 0], sizes = [1, 8, 32], strides = [1, 1, 1]} : vector<4x8x32xf32> to vector<1x8x32xf32>
    %35 = vector.shape_cast %34 : vector<1x8x32xf32> to vector<8x32xf32>
    %36 = vector.extract_strided_slice %33 {offsets = [1, 0, 0], sizes = [1, 8, 32], strides = [1, 1, 1]} : vector<4x8x32xf32> to vector<1x8x32xf32>
    %37 = vector.shape_cast %36 : vector<1x8x32xf32> to vector<8x32xf32>
    %38 = vector.extract_strided_slice %33 {offsets = [2, 0, 0], sizes = [1, 8, 32], strides = [1, 1, 1]} : vector<4x8x32xf32> to vector<1x8x32xf32>
    %39 = vector.shape_cast %38 : vector<1x8x32xf32> to vector<8x32xf32>
    %40 = vector.extract_strided_slice %33 {offsets = [3, 0, 0], sizes = [1, 8, 32], strides = [1, 1, 1]} : vector<4x8x32xf32> to vector<1x8x32xf32>
    %41 = vector.shape_cast %40 : vector<1x8x32xf32> to vector<8x32xf32>
    %42 = vector.shape_cast %1 : vector<16x32xf32> to vector<2x8x32xf32>
    %43 = arith.addf %42, %32 : vector<2x8x32xf32>
    %cst_18 = arith.constant dense<0.000000e+00> : vector<2x8xf32>
    %44 = vector.multi_reduction <add>, %43, %cst_18 [2] : vector<2x8x32xf32> to vector<2x8xf32>
    %45 = vector.shape_cast %44 : vector<2x8xf32> to vector<2x8x1xf32>
    %cst_19 = arith.constant dense<0.000000e+00> : vector<2x1xf32>
    %46 = vector.multi_reduction <add>, %45, %cst_19 [1] : vector<2x8x1xf32> to vector<2x1xf32>
    %47 = vector.shape_cast %46 : vector<2x1xf32> to vector<2x1x1xf32>
    %48 = arith.mulf %43, %43 : vector<2x8x32xf32>
    %cst_20 = arith.constant dense<0.000000e+00> : vector<2x8xf32>
    %49 = vector.multi_reduction <add>, %48, %cst_20 [2] : vector<2x8x32xf32> to vector<2x8xf32>
    %50 = vector.shape_cast %49 : vector<2x8xf32> to vector<2x8x1xf32>
    %cst_21 = arith.constant dense<0.000000e+00> : vector<2x1xf32>
    %51 = vector.multi_reduction <add>, %50, %cst_21 [1] : vector<2x8x1xf32> to vector<2x1xf32>
    %52 = vector.shape_cast %51 : vector<2x1xf32> to vector<2x1x1xf32>
    %cst_22 = arith.constant 3.906250e-03 : f32
    %53 = vector.broadcast %cst_22 : f32 to vector<2x1x1xf32>
    %54 = arith.mulf %47, %53 : vector<2x1x1xf32>
    %cst_23 = arith.constant 3.906250e-03 : f32
    %55 = vector.broadcast %cst_23 : f32 to vector<2x1x1xf32>
    %56 = arith.mulf %52, %55 : vector<2x1x1xf32>
    %57 = arith.mulf %54, %54 : vector<2x1x1xf32>
    %58 = arith.subf %56, %57 : vector<2x1x1xf32>
    %59 = vector.broadcast %54 : vector<2x1x1xf32> to vector<2x8x32xf32>
    %60 = arith.subf %43, %59 : vector<2x8x32xf32>
    %cst_24 = arith.constant 9.99999974E-6 : f32
    %61 = vector.broadcast %cst_24 : f32 to vector<2x1x1xf32>
    %62 = arith.addf %58, %61 : vector<2x1x1xf32>
    %63 = math.rsqrt %62 : vector<2x1x1xf32>
    %64 = vector.broadcast %63 : vector<2x1x1xf32> to vector<2x8x32xf32>
    %65 = arith.mulf %60, %64 : vector<2x8x32xf32>
    %66 = vector.shape_cast %35 : vector<8x32xf32> to vector<1x8x32xf32>
    %67 = vector.broadcast %66 : vector<1x8x32xf32> to vector<2x8x32xf32>
    %68 = arith.mulf %65, %67 : vector<2x8x32xf32>
    %69 = vector.shape_cast %37 : vector<8x32xf32> to vector<1x8x32xf32>
    %70 = vector.broadcast %69 : vector<1x8x32xf32> to vector<2x8x32xf32>
    %71 = arith.addf %68, %70 : vector<2x8x32xf32>
    %c0_25 = arith.constant 0 : index
    %c0_26 = arith.constant 0 : index
    %72 = vector.load %arg7[%c0_25, %c0_26] : memref<1x56xf32, #tpu.memory_space<vmem>>, vector<1x56xf32>
    %73 = vector.extract_strided_slice %72 {offsets = [0, 0], sizes = [1, 24], strides = [1, 1]} : vector<1x56xf32> to vector<1x24xf32>
    %74 = vector.extract_strided_slice %72 {offsets = [0, 24], sizes = [1, 32], strides = [1, 1]} : vector<1x56xf32> to vector<1x32xf32>
    %75 = vector.shape_cast %71 : vector<2x8x32xf32> to vector<16x32xf32>
    %76 = arith.truncf %75 : vector<16x32xf32> to vector<16x32xbf16>
    %c0_27 = arith.constant 0 : index
    %c0_28 = arith.constant 0 : index
    %77 = vector.load %arg5[%c0_27, %c0_28] : memref<32x24xbf16, #tpu.memory_space<vmem>>, vector<32x24xbf16>
    %cst_29 = arith.constant dense<0.000000e+00> : vector<16x24xf32>
    %78 = tpu.matmul %76, %77, %cst_29 {dimension_numbers = #tpu.dot_dimension_numbers<[1], [0], [0], [1], [0, 0, 1, 1], [], []>} : vector<16x32xbf16>, vector<32x24xbf16>, vector<16x24xf32> -> vector<16x24xf32>
    %79 = vector.broadcast %73 : vector<1x24xf32> to vector<16x24xf32>
    %80 = arith.addf %78, %79 : vector<16x24xf32>
    %cst_30 = arith.constant 0.000000e+00 : f32
    %81 = vector.broadcast %cst_30 : f32 to vector<16x24xf32>
    %82 = arith.maximumf %80, %81 : vector<16x24xf32>
    %83 = arith.truncf %82 : vector<16x24xf32> to vector<16x24xbf16>
    %c0_31 = arith.constant 0 : index
    %c0_32 = arith.constant 0 : index
    %84 = vector.load %arg6[%c0_31, %c0_32] : memref<24x32xbf16, #tpu.memory_space<vmem>>, vector<24x32xbf16>
    %cst_33 = arith.constant dense<0.000000e+00> : vector<16x32xf32>
    %85 = tpu.matmul %83, %84, %cst_33 {dimension_numbers = #tpu.dot_dimension_numbers<[1], [0], [0], [1], [0, 0, 1, 1], [], []>} : vector<16x24xbf16>, vector<24x32xbf16>, vector<16x32xf32> -> vector<16x32xf32>
    %86 = vector.broadcast %74 : vector<1x32xf32> to vector<16x32xf32>
    %87 = arith.addf %85, %86 : vector<16x32xf32>
    %88 = vector.shape_cast %87 : vector<16x32xf32> to vector<2x8x32xf32>
    %89 = arith.addf %71, %88 : vector<2x8x32xf32>
    %cst_34 = arith.constant dense<0.000000e+00> : vector<2x8xf32>
    %90 = vector.multi_reduction <add>, %89, %cst_34 [2] : vector<2x8x32xf32> to vector<2x8xf32>
    %91 = vector.shape_cast %90 : vector<2x8xf32> to vector<2x8x1xf32>
    %cst_35 = arith.constant dense<0.000000e+00> : vector<2x1xf32>
    %92 = vector.multi_reduction <add>, %91, %cst_35 [1] : vector<2x8x1xf32> to vector<2x1xf32>
    %93 = vector.shape_cast %92 : vector<2x1xf32> to vector<2x1x1xf32>
    %94 = arith.mulf %89, %89 : vector<2x8x32xf32>
    %cst_36 = arith.constant dense<0.000000e+00> : vector<2x8xf32>
    %95 = vector.multi_reduction <add>, %94, %cst_36 [2] : vector<2x8x32xf32> to vector<2x8xf32>
    %96 = vector.shape_cast %95 : vector<2x8xf32> to vector<2x8x1xf32>
    %cst_37 = arith.constant dense<0.000000e+00> : vector<2x1xf32>
    %97 = vector.multi_reduction <add>, %96, %cst_37 [1] : vector<2x8x1xf32> to vector<2x1xf32>
    %98 = vector.shape_cast %97 : vector<2x1xf32> to vector<2x1x1xf32>
    %cst_38 = arith.constant 3.906250e-03 : f32
    %99 = vector.broadcast %cst_38 : f32 to vector<2x1x1xf32>
    %100 = arith.mulf %93, %99 : vector<2x1x1xf32>
    %cst_39 = arith.constant 3.906250e-03 : f32
    %101 = vector.broadcast %cst_39 : f32 to vector<2x1x1xf32>
    %102 = arith.mulf %98, %101 : vector<2x1x1xf32>
    %103 = arith.mulf %100, %100 : vector<2x1x1xf32>
    %104 = arith.subf %102, %103 : vector<2x1x1xf32>
    %105 = vector.broadcast %100 : vector<2x1x1xf32> to vector<2x8x32xf32>
    %106 = arith.subf %89, %105 : vector<2x8x32xf32>
    %cst_40 = arith.constant 9.99999974E-6 : f32
    %107 = vector.broadcast %cst_40 : f32 to vector<2x1x1xf32>
    %108 = arith.addf %104, %107 : vector<2x1x1xf32>
    %109 = math.rsqrt %108 : vector<2x1x1xf32>
    %110 = vector.broadcast %109 : vector<2x1x1xf32> to vector<2x8x32xf32>
    %111 = arith.mulf %106, %110 : vector<2x8x32xf32>
    %112 = vector.shape_cast %39 : vector<8x32xf32> to vector<1x8x32xf32>
    %113 = vector.broadcast %112 : vector<1x8x32xf32> to vector<2x8x32xf32>
    %114 = arith.mulf %111, %113 : vector<2x8x32xf32>
    %115 = vector.shape_cast %41 : vector<8x32xf32> to vector<1x8x32xf32>
    %116 = vector.broadcast %115 : vector<1x8x32xf32> to vector<2x8x32xf32>
    %117 = arith.addf %114, %116 : vector<2x8x32xf32>
    %118 = vector.shape_cast %117 : vector<2x8x32xf32> to vector<2x256xf32>
    %c0_41 = arith.constant 0 : index
    %c0_42 = arith.constant 0 : index
    %119 = vector.load %arg9[%c0_41, %c0_42] : memref<2x256xf32, #tpu.memory_space<vmem>>, vector<2x256xf32>
    tpu.vector_store %arg9[%c0_41, %c0_42], %118 {strides = array<i32>} : memref<2x256xf32, #tpu.memory_space<vmem>>, vector<2x256xf32>,
    return
  }
  func.func @transform_0(%arg0: i32) -> (i32, i32) {
    %c0_i32 = arith.constant 0 : i32
    %c0_i32_0 = arith.constant 0 : i32
    return %arg0, %c0_i32 : i32, i32
  }
  func.func @transform_1(%arg0: i32) -> (i32, i32) {
    %c0_i32 = arith.constant 0 : i32
    %c0_i32_0 = arith.constant 0 : i32
    return %arg0, %c0_i32 : i32, i32
  }
  func.func @transform_2(%arg0: i32) -> (i32, i32) {
    %c0_i32 = arith.constant 0 : i32
    %c0_i32_0 = arith.constant 0 : i32
    %c0_i32_1 = arith.constant 0 : i32
    return %c0_i32, %c0_i32_0 : i32, i32
  }
  func.func @transform_3(%arg0: i32) -> (i32, i32) {
    %c0_i32 = arith.constant 0 : i32
    %c0_i32_0 = arith.constant 0 : i32
    %c0_i32_1 = arith.constant 0 : i32
    return %c0_i32, %c0_i32_0 : i32, i32
  }
  func.func @transform_4(%arg0: i32) -> (i32, i32) {
    %c0_i32 = arith.constant 0 : i32
    %c0_i32_0 = arith.constant 0 : i32
    %c0_i32_1 = arith.constant 0 : i32
    return %c0_i32, %c0_i32_0 : i32, i32
  }
  func.func @transform_5(%arg0: i32) -> (i32, i32) {
    %c0_i32 = arith.constant 0 : i32
    %c0_i32_0 = arith.constant 0 : i32
    %c0_i32_1 = arith.constant 0 : i32
    return %c0_i32, %c0_i32_0 : i32, i32
  }
  func.func @transform_6(%arg0: i32) -> (i32, i32) {
    %c0_i32 = arith.constant 0 : i32
    %c0_i32_0 = arith.constant 0 : i32
    %c0_i32_1 = arith.constant 0 : i32
    return %c0_i32, %c0_i32_0 : i32, i32
  }
  func.func @transform_7(%arg0: i32) -> (i32, i32, i32) {
    %c0_i32 = arith.constant 0 : i32
    %c0_i32_0 = arith.constant 0 : i32
    %c0_i32_1 = arith.constant 0 : i32
    %c0_i32_2 = arith.constant 0 : i32
    return %c0_i32, %c0_i32_0, %c0_i32_1 : i32, i32, i32
  }
  func.func @transform_8(%arg0: i32) -> (i32, i32) {
    %c0_i32 = arith.constant 0 : i32
    %c0_i32_0 = arith.constant 0 : i32
    return %arg0, %c0_i32 : i32, i32
  }
  func.func @transform_9(%arg0: i32) -> (i32, i32) {
    %c0_i32 = arith.constant 0 : i32
    %c0_i32_0 = arith.constant 0 : i32
    return %arg0, %c0_i32 : i32, i32
  }
}

</mosaic_0001>

<llo_original>
// kernel: tpu_custom_call.1
$region0: #{tpu_custom_call.1}
  #allocation0 [shape = 'u32[]', space=smem, size = 0x4, offset = 0x4, fixed_abs, tag = 'smem constant byte address 0x4 - core index']
  #allocation1 [shape = 'u32[144,128]{1,0:T(1,128)}', space=vmem, size = 0x12000, scoped, tag = 'internal scratch']
  %s0 = inlined_call_operand.hbm [shape: f32[16,16], index: 0, kind: input, shape index: {}]
  %s1 = inlined_call_operand.hbm [shape: f32[16,32], index: 1, kind: input, shape index: {}]
  %s2 = inlined_call_operand.hbm [shape: bf16[16,32], index: 2, kind: input, shape index: {}]
  %s3 = inlined_call_operand.hbm [shape: bf16[32,64], index: 3, kind: input, shape index: {}]
  %s4 = inlined_call_operand.hbm [shape: bf16[32,24], index: 4, kind: input, shape index: {}]
  %s5 = inlined_call_operand.hbm [shape: bf16[24,32], index: 5, kind: input, shape index: {}]
  %s6 = inlined_call_operand.hbm [shape: f32[1,56], index: 6, kind: input, shape index: {}]
  %s7 = inlined_call_operand.hbm [shape: f32[4,8,32], index: 7, kind: input, shape index: {}]
  %s8 = inlined_call_operand.hbm [shape: f32[2,256], index: 8, kind: output, shape index: {0}]
  %s9 = inlined_call_operand.hbm [shape: f32[2,64], index: 9, kind: output, shape index: {1}]
  %10 = xla_tuple %s8, %s9
  %s11 = sld [smem:[#allocation0]]
  $region82: #{tpu_custom_call.1} parent=0
    _
  %s13 = ssub.s32 1, %s11
  %s14 = scalar_select 0, %s13, %s11
  $region1: #{tpu_custom_call.1} parent=0
    #allocation2 [shape = 'u8[8192]{0}', space=vmem, size = 0x2000, scoped, tag = 'input window, operand 0, single buffered']
    #allocation3 [shape = 's32[1]{0}', space=sflag, size = 0x4, scoped, tag = 'scoped memory for tpu_custom_call.1']
    #allocation4 [shape = 's32[1]{0}', space=sflag, size = 0x4, scoped, tag = 'scoped memory for tpu_custom_call.1']
    #allocation5 [shape = 'u8[8192]{0}', space=vmem, size = 0x2000, scoped, tag = 'input window, operand 1, single buffered']
    #allocation6 [shape = 's32[1]{0}', space=sflag, size = 0x4, scoped, tag = 'scoped memory for tpu_custom_call.1']
    #allocation7 [shape = 'u8[4096]{0}', space=vmem, size = 0x1000, scoped, tag = 'input window, operand 2, single buffered']
    #allocation8 [shape = 'u8[8192]{0}', space=vmem, size = 0x2000, scoped, tag = 'input window, operand 3, single buffered']
    #allocation9 [shape = 's32[1]{0}', space=sflag, size = 0x4, scoped, tag = 'scoped memory for tpu_custom_call.1']
    #allocation10 [shape = 'u8[8192]{0}', space=vmem, size = 0x2000, scoped, tag = 'input window, operand 4, single buffered']
    #allocation11 [shape = 'u8[6144]{0}', space=vmem, size = 0x1800, scoped, tag = 'input window, operand 5, single buffered']
    #allocation12 [shape = 's32[1]{0}', space=sflag, size = 0x4, scoped, tag = 'scoped memory for tpu_custom_call.1']
    #allocation13 [shape = 'u8[512]{0}', space=vmem, size = 0x400, scoped, tag = 'input window, operand 6, single buffered']
    #allocation14 [shape = 'u8[16384]{0}', space=vmem, size = 0x4000, scoped, tag = 'input window, operand 7, single buffered']
    #allocation15 [shape = 's32[1]{0}', space=sflag, size = 0x4, scoped, tag = 'scoped memory for tpu_custom_call.1']
    #allocation16 [shape = 'u8[2048]{0}', space=vmem, size = 0x800, scoped, tag = 'output window, operand 0, single buffered']
    #allocation17 [shape = 'u8[1024]{0}', space=vmem, size = 0x400, scoped, tag = 'output window, operand 1, single buffered']
    #allocation18 [shape = 's32[1]{0}', space=sflag, size = 0x4, scoped, tag = 'scoped memory for tpu_custom_call.1']
    %15 = vsyncpa [#allocation3], 0
    %16 = vsyncpa [#allocation6], 0
    %17 = vsyncpa [#allocation9], 0
    %18 = vsyncpa [#allocation12], 0
    %19 = vsyncpa [#allocation15], 0
    %20 = vsyncpa [#allocation4], 0
    %21 = vsyncpa [#allocation18], 0
    // Predicated region
    $region2: #{tpu_custom_call.1} parent=1 // pred_check
      _
    $region3: #{tpu_custom_call.1} parent=1 // pred_check_branch
      %23 = sbr.rel (0) target = $region5
    $region4: #{tpu_custom_call.1} parent=1 // pred_region
      %s25 = ssub.s32 256, 256
      %26 = vsyncadd [#allocation3], %s25
      %s27 = sshll.u32 [#allocation2], 4
      %s28 = int_to_ptr.vmem [resolvable:$true] %s27
      %33 = dma.hbm_to_vmem [thread:$0]  %s0, 256, %s28, [#allocation3], 128, 128, 8
    $region5: #{tpu_custom_call.1} parent=1 // pred_fallthru
      _
    // Predicated region
    $region6: #{tpu_custom_call.1} parent=1 // pred_check
      _
    $region7: #{tpu_custom_call.1} parent=1 // pred_check_branch
      %35 = sbr.rel (0) target = $region9
    $region8: #{tpu_custom_call.1} parent=1 // pred_region
      %s37 = ssub.s32 256, 256
      %38 = vsyncadd [#allocation6], %s37
      %s39 = sshll.u32 [#allocation5], 4
      %s40 = int_to_ptr.vmem [resolvable:$true] %s39
      %45 = dma.hbm_to_vmem [thread:$0]  %s1, 256, %s40, [#allocation6], 128, 128, 8
    $region9: #{tpu_custom_call.1} parent=1 // pred_fallthru
      _
    // Predicated region
    $region10: #{tpu_custom_call.1} parent=1 // pred_check
      _
    $region11: #{tpu_custom_call.1} parent=1 // pred_check_branch
      %47 = sbr.rel (0) target = $region13
    $region12: #{tpu_custom_call.1} parent=1 // pred_region
      %s49 = ssub.s32 128, 128
      %50 = vsyncadd [#allocation6], %s49
      %s51 = sshll.u32 [#allocation7], 4
      %s52 = int_to_ptr.vmem [resolvable:$true] %s51
      %57 = dma.hbm_to_vmem [thread:$0]  %s2, 128, %s52, [#allocation6], 64, 64, 4
    $region13: #{tpu_custom_call.1} parent=1 // pred_fallthru
      _
    // Predicated region
    $region14: #{tpu_custom_call.1} parent=1 // pred_check
      _
    $region15: #{tpu_custom_call.1} parent=1 // pred_check_branch
      %59 = sbr.rel (0) target = $region17
    $region16: #{tpu_custom_call.1} parent=1 // pred_region
      %s61 = ssub.s32 256, 256
      %62 = vsyncadd [#allocation9], %s61
      %s63 = sshll.u32 [#allocation8], 4
      %s64 = int_to_ptr.vmem [resolvable:$true] %s63
      %69 = dma.hbm_to_vmem [thread:$0]  %s3, 256, %s64, [#allocation9], 64, 64, 4
    $region17: #{tpu_custom_call.1} parent=1 // pred_fallthru
      _
    // Predicated region
    $region18: #{tpu_custom_call.1} parent=1 // pred_check
      _
    $region19: #{tpu_custom_call.1} parent=1 // pred_check_branch
      %71 = sbr.rel (0) target = $region21
    $region20: #{tpu_custom_call.1} parent=1 // pred_region
      %s73 = ssub.s32 256, 256
      %74 = vsyncadd [#allocation9], %s73
      %s75 = sshll.u32 [#allocation10], 4
      %s76 = int_to_ptr.vmem [resolvable:$true] %s75
      %81 = dma.hbm_to_vmem [thread:$0]  %s4, 256, %s76, [#allocation9], 64, 64, 4
    $region21: #{tpu_custom_call.1} parent=1 // pred_fallthru
      _
    // Predicated region
    $region22: #{tpu_custom_call.1} parent=1 // pred_check
      _
    $region23: #{tpu_custom_call.1} parent=1 // pred_check_branch
      %83 = sbr.rel (0) target = $region25
    $region24: #{tpu_custom_call.1} parent=1 // pred_region
      %s85 = ssub.s32 192, 192
      %86 = vsyncadd [#allocation12], %s85
      %s87 = sshll.u32 [#allocation11], 4
      %s88 = int_to_ptr.vmem [resolvable:$true] %s87
      %93 = dma.hbm_to_vmem [thread:$0]  %s5, 192, %s88, [#allocation12], 64, 64, 4
    $region25: #{tpu_custom_call.1} parent=1 // pred_fallthru
      _
    // Predicated region
    $region26: #{tpu_custom_call.1} parent=1 // pred_check
      _
    $region27: #{tpu_custom_call.1} parent=1 // pred_check_branch
      %95 = sbr.rel (0) target = $region29
    $region28: #{tpu_custom_call.1} parent=1 // pred_region
      %s97 = ssub.s32 16, 16
      %98 = vsyncadd [#allocation12], %s97
      %s100 = sshll.u32 [#allocation13], 4
      %s101 = int_to_ptr.vmem [resolvable:$true] %s100
      %103 = dma.hbm_to_vmem [thread:$0]  %s6, 16, %s101, [#allocation12]
    $region29: #{tpu_custom_call.1} parent=1 // pred_fallthru
      _
    // Predicated region
    $region30: #{tpu_custom_call.1} parent=1 // pred_check
      _
    $region31: #{tpu_custom_call.1} parent=1 // pred_check_branch
      %105 = sbr.rel (0) target = $region33
    $region32: #{tpu_custom_call.1} parent=1 // pred_region
      %s107 = ssub.s32 512, 512
      %108 = vsyncadd [#allocation15], %s107
      %s109 = sshll.u32 [#allocation14], 4
      %s110 = int_to_ptr.vmem [resolvable:$true] %s109
      %115 = dma.hbm_to_vmem [thread:$0]  %s7, 512, %s110, [#allocation15], 128, 128, 8
    $region33: #{tpu_custom_call.1} parent=1 // pred_fallthru
      _
    // Predicated region
    $region34: #{tpu_custom_call.1} parent=1 // pred_check
      _
    $region35: #{tpu_custom_call.1} parent=1 // pred_check_branch
      %117 = sbr.rel (0) target = $region37
    $region36: #{tpu_custom_call.1} parent=1 // pred_region
      %118 = dma.done [#allocation3], 256
    $region37: #{tpu_custom_call.1} parent=1 // pred_fallthru
      _
    // Predicated region
    $region38: #{tpu_custom_call.1} parent=1 // pred_check
      _
    $region39: #{tpu_custom_call.1} parent=1 // pred_check_branch
      %120 = sbr.rel (0) target = $region41
    $region40: #{tpu_custom_call.1} parent=1 // pred_region
      %121 = dma.done [#allocation6], 256
    $region41: #{tpu_custom_call.1} parent=1 // pred_fallthru
      _
    // Predicated region
    $region42: #{tpu_custom_call.1} parent=1 // pred_check
      _
    $region43: #{tpu_custom_call.1} parent=1 // pred_check_branch
      %123 = sbr.rel (0) target = $region45
    $region44: #{tpu_custom_call.1} parent=1 // pred_region
      %124 = dma.done [#allocation6], 128
    $region45: #{tpu_custom_call.1} parent=1 // pred_fallthru
      _
    // Predicated region
    $region46: #{tpu_custom_call.1} parent=1 // pred_check
      _
    $region47: #{tpu_custom_call.1} parent=1 // pred_check_branch
      %126 = sbr.rel (0) target = $region49
    $region48: #{tpu_custom_call.1} parent=1 // pred_region
      %127 = dma.done [#allocation9], 256
    $region49: #{tpu_custom_call.1} parent=1 // pred_fallthru
      _
    // Predicated region
    $region50: #{tpu_custom_call.1} parent=1 // pred_check
      _
    $region51: #{tpu_custom_call.1} parent=1 // pred_check_branch
      %129 = sbr.rel (0) target = $region53
    $region52: #{tpu_custom_call.1} parent=1 // pred_region
      %130 = dma.done [#allocation9], 256
    $region53: #{tpu_custom_call.1} parent=1 // pred_fallthru
      _
    // Predicated region
    $region54: #{tpu_custom_call.1} parent=1 // pred_check
      _
    $region55: #{tpu_custom_call.1} parent=1 // pred_check_branch
      %132 = sbr.rel (0) target = $region57
    $region56: #{tpu_custom_call.1} parent=1 // pred_region
      %133 = dma.done [#allocation12], 192
    $region57: #{tpu_custom_call.1} parent=1 // pred_fallthru
      _
    // Predicated region
    $region58: #{tpu_custom_call.1} parent=1 // pred_check
      _
    $region59: #{tpu_custom_call.1} parent=1 // pred_check_branch
      %135 = sbr.rel (0) target = $region61
    $region60: #{tpu_custom_call.1} parent=1 // pred_region
      %136 = dma.done [#allocation12], 16
    $region61: #{tpu_custom_call.1} parent=1 // pred_fallthru
      _
    // Predicated region
    $region62: #{tpu_custom_call.1} parent=1 // pred_check
      _
    $region63: #{tpu_custom_call.1} parent=1 // pred_check_branch
      %138 = sbr.rel (0) target = $region65
    $region64: #{tpu_custom_call.1} parent=1 // pred_region
      %139 = dma.done [#allocation15], 512
    $region65: #{tpu_custom_call.1} parent=1 // pred_fallthru
      _
    %v141 = vld [vmem:[#allocation2] sm:$0xff]
    %v142 = vld [vmem:[#allocation2 + $0x8] sm:$0xff]
    %v143 = vld [vmem:[#allocation5] sm:$0xff]
    %v144 = vld [vmem:[#allocation5 + $0x8] sm:$0xff]
    %v145 = vpack.c.bf16 %v142, %v141
    %v146 = vld [vmem:[#allocation7] sm:$0xf]
    %v147 = vld [vmem:[#allocation7 + $0x4] sm:$0xf]
    %v150 = vunpack.c.l.b16 %v146
    %v151 = vunpack.c.l.b16 %v147
    %v152 = vpack.c.b16 %v151, %v150
    %vm154 = vcmask 130048
    %v156 = vsel %vm154, %v145, 0
    %158 = vmatprep.subr.bf16.mxu0 0
    %159 = vmatpush1.bf16.msra.mxu0 %v152
    %160 = vmatprep.subr.bf16.mxu0 0
    %161 = vmatpush1.bf16.msra.mxu0 0
    %162 = vmatprep.subr.bf16.mxu0 0
    %163 = vmatpush1.bf16.msra.mxu0 0
    %164 = vmatprep.subr.bf16.mxu0 0
    %165 = vmatpush1.bf16.msra.mxu0 0
    %166 = vmatprep.subr.bf16.mxu0 0
    %167 = vmatpush1.bf16.msra.mxu0 0
    %168 = vmatprep.subr.bf16.mxu0 0
    %169 = vmatpush1.bf16.msra.mxu0 0
    %170 = vmatprep.subr.bf16.mxu0 0
    %171 = vmatpush1.bf16.msra.mxu0 0
    %172 = vmatprep.subr.bf16.mxu0 0
    %173 = vmatpush1.bf16.msra.mxu0 0
    %174 = vmatprep.subr.bf16.mxu0 0
    %175 = vmatpush1.bf16.msra.mxu0 0
    %176 = vmatprep.subr.bf16.mxu0 0
    %177 = vmatpush1.bf16.msra.mxu0 0
    %178 = vmatprep.subr.bf16.mxu0 0
    %179 = vmatpush1.bf16.msra.mxu0 0
    %180 = vmatprep.subr.bf16.mxu0 0
    %181 = vmatpush1.bf16.msra.mxu0 0
    %182 = vmatprep.subr.bf16.mxu0 0
    %183 = vmatpush1.bf16.msra.mxu0 0
    %184 = vmatprep.subr.bf16.mxu0 0
    %185 = vmatpush1.bf16.msra.mxu0 0
    %186 = vmatprep.subr.bf16.mxu0 0
    %187 = vmatpush1.bf16.msra.mxu0 0
    %188 = vmatprep.subr.bf16.mxu0 0
    %189 = vmatpush1.bf16.msra.mxu0 0
    %190 = vmatprep.mubr.bf16.mxu0 0
    %191 = vmatmul.mubr.bf16.gmra.mrb[0].mxu0 %v156
    %v192 = vpop.f32.mrb[0].mxu0
    %v193 = vadd.f32 0.0, %v192
    %v194 = vpop.f32.mrb[0].mxu0
    %v195 = vpop.f32.mrb[0].mxu0
    %v196 = vadd.f32 0.0, %v195
    %v197 = vpop.f32.mrb[0].mxu0
    %198 = vdwg.mxu0
    %v199 = vpack.c.bf16 %v144, %v143
    %v200 = vld [vmem:[#allocation8] sm:$0xf]
    %v201 = vld [vmem:[#allocation8 + $0x4] sm:$0xf]
    %v202 = vld [vmem:[#allocation8 + $0x8] sm:$0xf]
    %v203 = vld [vmem:[#allocation8 + $0xc] sm:$0xf]
    %v208 = vunpack.c.l.b16 %v200
    %v209 = vunpack.c.l.b16 %v201
    %v210 = vunpack.c.l.b16 %v202
    %v211 = vunpack.c.l.b16 %v203
    %v212 = vpack.c.b16 %v209, %v208
    %v213 = vpack.c.b16 %v211, %v210
    %vm216 = vcmask 261120
    %v218 = vsel %vm216, %v199, 0
    %220 = vmatprep.subr.bf16.mxu0 0
    %221 = vmatpush1.bf16.msra.mxu0 %v212
    %222 = vmatprep.subr.bf16.mxu0 0
    %223 = vmatpush1.bf16.msra.mxu0 %v213
    %224 = vmatprep.subr.bf16.mxu0 0
    %225 = vmatpush1.bf16.msra.mxu0 0
    %226 = vmatprep.subr.bf16.mxu0 0
    %227 = vmatpush1.bf16.msra.mxu0 0
    %228 = vmatprep.subr.bf16.mxu0 0
    %229 = vmatpush1.bf16.msra.mxu0 0
    %230 = vmatprep.subr.bf16.mxu0 0
    %231 = vmatpush1.bf16.msra.mxu0 0
    %232 = vmatprep.subr.bf16.mxu0 0
    %233 = vmatpush1.bf16.msra.mxu0 0
    %234 = vmatprep.subr.bf16.mxu0 0
    %235 = vmatpush1.bf16.msra.mxu0 0
    %236 = vmatprep.subr.bf16.mxu0 0
    %237 = vmatpush1.bf16.msra.mxu0 0
    %238 = vmatprep.subr.bf16.mxu0 0
    %239 = vmatpush1.bf16.msra.mxu0 0
    %240 = vmatprep.subr.bf16.mxu0 0
    %241 = vmatpush1.bf16.msra.mxu0 0
    %242 = vmatprep.subr.bf16.mxu0 0
    %243 = vmatpush1.bf16.msra.mxu0 0
    %244 = vmatprep.subr.bf16.mxu0 0
    %245 = vmatpush1.bf16.msra.mxu0 0
    %246 = vmatprep.subr.bf16.mxu0 0
    %247 = vmatpush1.bf16.msra.mxu0 0
    %248 = vmatprep.subr.bf16.mxu0 0
    %249 = vmatpush1.bf16.msra.mxu0 0
    %250 = vmatprep.subr.bf16.mxu0 0
    %251 = vmatpush1.bf16.msra.mxu0 0
    %252 = vmatprep.mubr.bf16.mxu0 0
    %253 = vmatmul.mubr.bf16.gmra.mrb[0].mxu0 %v218
    %v254 = vpop.f32.mrb[0].mxu0
    %v255 = vadd.f32 0.0, %v254
    %v256 = vpop.f32.mrb[0].mxu0
    %v257 = vpop.f32.mrb[0].mxu0
    %v258 = vadd.f32 0.0, %v257
    %v259 = vpop.f32.mrb[0].mxu0
    %260 = vdwg.mxu0
    %v261 = vpack.c.bf16 %v196, %v193
    %v263 = vunpack.c.l.b16 %v261
    %v264 = vunpack.c.h.b16 %v261
    %v265 = vpack.c.b16 %v263, %v263
    %v266 = vpack.c.b16 %v264, %v264
    %v267 = vpack.c.bf16 %v258, %v255
    %v269 = vunpack.c.l.b16 %v267
    %v270 = vunpack.c.h.b16 %v267
    %v271 = vpack.c.b16 %v269, %v269
    %v272 = vpack.c.b16 %v270, %v270
    %v274 = vsel %vm216, %v265, 0
    %v277 = vsel %vm216, %v271, 0
    %279 = vmatprep.subr.bf16.mxu0 0
    %280 = vmatpush1.bf16.xpose.msra.mxu0 %v277
    %281 = vmatprep.subr.bf16.mxu0 0
    %282 = vmatpush1.bf16.xpose.msra.mxu0 0
    %283 = vmatprep.subr.bf16.mxu0 0
    %284 = vmatpush1.bf16.xpose.msra.mxu0 0
    %285 = vmatprep.subr.bf16.mxu0 0
    %286 = vmatpush1.bf16.xpose.msra.mxu0 0
    %287 = vmatprep.subr.bf16.mxu0 0
    %288 = vmatpush1.bf16.xpose.msra.mxu0 0
    %289 = vmatprep.subr.bf16.mxu0 0
    %290 = vmatpush1.bf16.xpose.msra.mxu0 0
    %291 = vmatprep.subr.bf16.mxu0 0
    %292 = vmatpush1.bf16.xpose.msra.mxu0 0
    %293 = vmatprep.subr.bf16.mxu0 0
    %294 = vmatpush1.bf16.xpose.msra.mxu0 0
    %295 = vmatprep.subr.bf16.mxu0 0
    %296 = vmatpush1.bf16.xpose.msra.mxu0 0
    %297 = vmatprep.subr.bf16.mxu0 0
    %298 = vmatpush1.bf16.xpose.msra.mxu0 0
    %299 = vmatprep.subr.bf16.mxu0 0
    %300 = vmatpush1.bf16.xpose.msra.mxu0 0
    %301 = vmatprep.subr.bf16.mxu0 0
    %302 = vmatpush1.bf16.xpose.msra.mxu0 0
    %303 = vmatprep.subr.bf16.mxu0 0
    %304 = vmatpush1.bf16.xpose.msra.mxu0 0
    %305 = vmatprep.subr.bf16.mxu0 0
    %306 = vmatpush1.bf16.xpose.msra.mxu0 0
    %307 = vmatprep.subr.bf16.mxu0 0
    %308 = vmatpush1.bf16.xpose.msra.mxu0 0
    %309 = vmatprep.subr.bf16.mxu0 0
    %310 = vmatpush1.bf16.xpose.msra.mxu0 0
    %311 = vmatprep.mubr.bf16.mxu0 0
    %312 = vmatmul.mubr.bf16.gmra.mrb[0].mxu0 %v274
    %v313 = vpop.f32.mrb[0].mxu0
    %v314 = vadd.f32 0.0, %v313
    %v315 = vpop.f32.mrb[0].mxu0
    %v316 = vpop.f32.mrb[0].mxu0
    %v317 = vpop.f32.mrb[0].mxu0
    %318 = vdwg.mxu0
    %v320 = vsel %vm216, %v266, 0
    %v323 = vsel %vm216, %v272, 0
    %325 = vmatprep.subr.bf16.mxu0 0
    %326 = vmatpush1.bf16.xpose.msra.mxu0 %v323
    %327 = vmatprep.subr.bf16.mxu0 0
    %328 = vmatpush1.bf16.xpose.msra.mxu0 0
    %329 = vmatprep.subr.bf16.mxu0 0
    %330 = vmatpush1.bf16.xpose.msra.mxu0 0
    %331 = vmatprep.subr.bf16.mxu0 0
    %332 = vmatpush1.bf16.xpose.msra.mxu0 0
    %333 = vmatprep.subr.bf16.mxu0 0
    %334 = vmatpush1.bf16.xpose.msra.mxu0 0
    %335 = vmatprep.subr.bf16.mxu0 0
    %336 = vmatpush1.bf16.xpose.msra.mxu0 0
    %337 = vmatprep.subr.bf16.mxu0 0
    %338 = vmatpush1.bf16.xpose.msra.mxu0 0
    %339 = vmatprep.subr.bf16.mxu0 0
    %340 = vmatpush1.bf16.xpose.msra.mxu0 0
    %341 = vmatprep.subr.bf16.mxu0 0
    %342 = vmatpush1.bf16.xpose.msra.mxu0 0
    %343 = vmatprep.subr.bf16.mxu0 0
    %344 = vmatpush1.bf16.xpose.msra.mxu0 0
    %345 = vmatprep.subr.bf16.mxu0 0
    %346 = vmatpush1.bf16.xpose.msra.mxu0 0
    %347 = vmatprep.subr.bf16.mxu0 0
    %348 = vmatpush1.bf16.xpose.msra.mxu0 0
    %349 = vmatprep.subr.bf16.mxu0 0
    %350 = vmatpush1.bf16.xpose.msra.mxu0 0
    %351 = vmatprep.subr.bf16.mxu0 0
    %352 = vmatpush1.bf16.xpose.msra.mxu0 0
    %353 = vmatprep.subr.bf16.mxu0 0
    %354 = vmatpush1.bf16.xpose.msra.mxu0 0
    %355 = vmatprep.subr.bf16.mxu0 0
    %356 = vmatpush1.bf16.xpose.msra.mxu0 0
    %357 = vmatprep.mubr.bf16.mxu0 0
    %358 = vmatmul.mubr.bf16.gmra.mrb[0].mxu0 %v320
    %v359 = vpop.f32.mrb[0].mxu0
    %v360 = vadd.f32 0.0, %v359
    %v361 = vpop.f32.mrb[0].mxu0
    %v362 = vpop.f32.mrb[0].mxu0
    %v363 = vpop.f32.mrb[0].mxu0
    %364 = vdwg.mxu0
    %v365 = vmul.f32 %v314, 0.17677669
    %v366 = vmul.f32 %v360, 0.17677669
    %vm367 = vcmask 64512
    %v368 = vsel %vm367, %v365, -inf
    %369 = vmax.xlane.f32.xlu0 %v368
    %v370 = vpop.xlane.xlu0 %369
    %v371 = vsel %vm367, %v366, -inf
    %372 = vmax.xlane.f32.xlu0 %v371
    %v373 = vpop.xlane.xlu0 %372
    %v374 = vsub.f32 %v365, %v370
    %v375 = vsub.f32 %v366, %v373
    %v376 = vmul.f32 %v374, 1.442695
    %v377 = vpow.pop %v376
    %v378 = vmul.f32 %v375, 1.442695
    %v379 = vpow.pop %v378
    %v380 = vsel %vm367, %v377, 0.0
    %381 = vadd.xlane.f32.xlu0 %v380
    %v382 = vpop.xlane.xlu0 %381
    %v383 = vsel %vm367, %v379, 0.0
    %384 = vadd.xlane.f32.xlu0 %v383
    %v385 = vpop.xlane.xlu0 %384
    %v386 = vrcp.pop %v382
    %v387 = vrcp.pop %v385
    %v388 = vmul.f32 %v377, %v386
    %v389 = vmul.f32 %v379, %v387
    %v390 = vcombine.high %v388, 0.0
    %v392 = vunpack.c.l.s4 1983009808
    %v393 = vunpack.c.0.s8 %v392
    %v394 = vlaneseq
    %v395 = vshrl.u32 %v394, 7
    %v396 = vsub.s32 %v393, %v395
    %v397 = vrot.slane %v388, %v396
    %v399 = vunpack.c.l.s4 1983009808
    %v400 = vunpack.c.0.s8 %v399
    %v401 = vlaneseq
    %v402 = vshrl.u32 %v401, 7
    %v403 = vsub.s32 %v400, %v402
    %v404 = vrot.slane %v390, %v403
    %v405 = vcombine.high %v389, 0.0
    %v407 = vunpack.c.l.s4 1983009808
    %v408 = vunpack.c.0.s8 %v407
    %v409 = vlaneseq
    %v410 = vshrl.u32 %v409, 7
    %v411 = vsub.s32 %v408, %v410
    %v412 = vrot.slane %v389, %v411
    %v414 = vunpack.c.l.s4 1983009808
    %v415 = vunpack.c.0.s8 %v414
    %v416 = vlaneseq
    %v417 = vshrl.u32 %v416, 7
    %v418 = vsub.s32 %v415, %v417
    %v419 = vrot.slane %v405, %v418
    %v420 = vcombine.low %v397, %v412
    %v421 = vcombine.high %v397, %v412
    %v423 = vunpack.c.l.s4 1934713408
    %v424 = vunpack.c.0.s8 %v423
    %v425 = vlaneseq
    %v426 = vshrl.u32 %v425, 7
    %v427 = vsub.s32 %v424, %v426
    %v428 = vrot.slane %v420, %v427
    %v430 = vunpack.c.l.s4 1934713408
    %v431 = vunpack.c.0.s8 %v430
    %v432 = vlaneseq
    %v433 = vshrl.u32 %v432, 7
    %v434 = vsub.s32 %v431, %v433
    %v435 = vrot.slane %v421, %v434
    %v436 = vcombine.low %v404, %v419
    %v437 = vcombine.high %v404, %v419
    %v439 = vunpack.c.l.s4 1934713408
    %v440 = vunpack.c.0.s8 %v439
    %v441 = vlaneseq
    %v442 = vshrl.u32 %v441, 7
    %v443 = vsub.s32 %v440, %v442
    %v444 = vrot.slane %v436, %v443
    %v446 = vunpack.c.l.s4 1934713408
    %v447 = vunpack.c.0.s8 %v446
    %v448 = vlaneseq
    %v449 = vshrl.u32 %v448, 7
    %v450 = vsub.s32 %v447, %v449
    %v451 = vrot.slane %v437, %v450
    %v452 = vcombine.high %v428, 0.0
    %v453 = vcombine.high %v435, 0.0
    %v454 = vcombine.high %v444, 0.0
    %v455 = vcombine.high %v451, 0.0
    %457 = vrot.lane.b32.xlu0 %v452, 8
    %v458 = vpop.permute.xlu0 %457
    %461 = vrot.lane.b32.xlu0 %v435, 16
    %v462 = vpop.permute.xlu0 %461
    %465 = vrot.lane.b32.xlu0 %v453, 24
    %v466 = vpop.permute.xlu0 %465
    %469 = vrot.lane.b32.xlu0 %v444, 32
    %v470 = vpop.permute.xlu0 %469
    %473 = vrot.lane.b32.xlu0 %v454, 40
    %v474 = vpop.permute.xlu0 %473
    %477 = vrot.lane.b32.xlu0 %v451, 48
    %v478 = vpop.permute.xlu0 %477
    %481 = vrot.lane.b32.xlu0 %v455, 56
    %v482 = vpop.permute.xlu0 %481
    %v484 = vsel %vm367, %v428, %v458
    %v485 = vsel %vm154, %v484, %v462
    %vm486 = vcmask 195584
    %v487 = vsel %vm486, %v485, %v466
    %v488 = vsel %vm216, %v487, %v470
    %vm489 = vcmask 326656
    %v490 = vsel %vm489, %v488, %v474
    %vm491 = vcmask 392192
    %v492 = vsel %vm491, %v490, %v478
    %vm493 = vcmask 457728
    %v494 = vsel %vm493, %v492, %v482
    %vm495 = vcmask 517120
    %496 = vst.msk [vmem:[#allocation17] sm:$0x3] %vm495, %v494
    %v497 = vpack.c.bf16 %v388, %v388
    %v498 = vpack.c.bf16 %v389, %v389
    %499 = vrot.lane.b32.xlu0 %v271, 96
    %v500 = vpop.permute.xlu0 %499
    %v502 = vsel %vm367, %v497, 0
    %vm504 = vcmask 1043456
    %v506 = vsel %vm504, %v500, 0
    %508 = vmatprep.subr.bf16.mxu0 0
    %509 = vmatpush1.bf16.msra.mxu0 %v506
    %510 = vmatprep.subr.bf16.mxu0 0
    %511 = vmatpush1.bf16.msra.mxu0 0
    %512 = vmatprep.subr.bf16.mxu0 0
    %513 = vmatpush1.bf16.msra.mxu0 0
    %514 = vmatprep.subr.bf16.mxu0 0
    %515 = vmatpush1.bf16.msra.mxu0 0
    %516 = vmatprep.subr.bf16.mxu0 0
    %517 = vmatpush1.bf16.msra.mxu0 0
    %518 = vmatprep.subr.bf16.mxu0 0
    %519 = vmatpush1.bf16.msra.mxu0 0
    %520 = vmatprep.subr.bf16.mxu0 0
    %521 = vmatpush1.bf16.msra.mxu0 0
    %522 = vmatprep.subr.bf16.mxu0 0
    %523 = vmatpush1.bf16.msra.mxu0 0
    %524 = vmatprep.subr.bf16.mxu0 0
    %525 = vmatpush1.bf16.msra.mxu0 0
    %526 = vmatprep.subr.bf16.mxu0 0
    %527 = vmatpush1.bf16.msra.mxu0 0
    %528 = vmatprep.subr.bf16.mxu0 0
    %529 = vmatpush1.bf16.msra.mxu0 0
    %530 = vmatprep.subr.bf16.mxu0 0
    %531 = vmatpush1.bf16.msra.mxu0 0
    %532 = vmatprep.subr.bf16.mxu0 0
    %533 = vmatpush1.bf16.msra.mxu0 0
    %534 = vmatprep.subr.bf16.mxu0 0
    %535 = vmatpush1.bf16.msra.mxu0 0
    %536 = vmatprep.subr.bf16.mxu0 0
    %537 = vmatpush1.bf16.msra.mxu0 0
    %538 = vmatprep.subr.bf16.mxu0 0
    %539 = vmatpush1.bf16.msra.mxu0 0
    %540 = vmatprep.mubr.bf16.mxu0 0
    %541 = vmatmul.mubr.bf16.gmra.mrb[0].mxu0 %v502
    %v542 = vpop.f32.mrb[0].mxu0
    %v543 = vadd.f32 0.0, %v542
    %v544 = vpop.f32.mrb[0].mxu0
    %v545 = vpop.f32.mrb[0].mxu0
    %v546 = vpop.f32.mrb[0].mxu0
    %547 = vdwg.mxu0
    %548 = vrot.lane.b32.xlu0 %v272, 96
    %v549 = vpop.permute.xlu0 %548
    %v551 = vsel %vm367, %v498, 0
    %v554 = vsel %vm504, %v549, 0
    %556 = vmatprep.subr.bf16.mxu0 0
    %557 = vmatpush1.bf16.msra.mxu0 %v554
    %558 = vmatprep.subr.bf16.mxu0 0
    %559 = vmatpush1.bf16.msra.mxu0 0
    %560 = vmatprep.subr.bf16.mxu0 0
    %561 = vmatpush1.bf16.msra.mxu0 0
    %562 = vmatprep.subr.bf16.mxu0 0
    %563 = vmatpush1.bf16.msra.mxu0 0
    %564 = vmatprep.subr.bf16.mxu0 0
    %565 = vmatpush1.bf16.msra.mxu0 0
    %566 = vmatprep.subr.bf16.mxu0 0
    %567 = vmatpush1.bf16.msra.mxu0 0
    %568 = vmatprep.subr.bf16.mxu0 0
    %569 = vmatpush1.bf16.msra.mxu0 0
    %570 = vmatprep.subr.bf16.mxu0 0
    %571 = vmatpush1.bf16.msra.mxu0 0
    %572 = vmatprep.subr.bf16.mxu0 0
    %573 = vmatpush1.bf16.msra.mxu0 0
    %574 = vmatprep.subr.bf16.mxu0 0
    %575 = vmatpush1.bf16.msra.mxu0 0
    %576 = vmatprep.subr.bf16.mxu0 0
    %577 = vmatpush1.bf16.msra.mxu0 0
    %578 = vmatprep.subr.bf16.mxu0 0
    %579 = vmatpush1.bf16.msra.mxu0 0
    %580 = vmatprep.subr.bf16.mxu0 0
    %581 = vmatpush1.bf16.msra.mxu0 0
    %582 = vmatprep.subr.bf16.mxu0 0
    %583 = vmatpush1.bf16.msra.mxu0 0
    %584 = vmatprep.subr.bf16.mxu0 0
    %585 = vmatpush1.bf16.msra.mxu0 0
    %586 = vmatprep.subr.bf16.mxu0 0
    %587 = vmatpush1.bf16.msra.mxu0 0
    %588 = vmatprep.mubr.bf16.mxu0 0
    %589 = vmatmul.mubr.bf16.gmra.mrb[0].mxu0 %v551
    %v590 = vpop.f32.mrb[0].mxu0
    %v591 = vadd.f32 0.0, %v590
    %v592 = vpop.f32.mrb[0].mxu0
    %v593 = vpop.f32.mrb[0].mxu0
    %v594 = vpop.f32.mrb[0].mxu0
    %595 = vdwg.mxu0
    %v596 = vld [vmem:[#allocation14] sm:$0xff]
    %v597 = vld [vmem:[#allocation14 + $0x8] sm:$0xff]
    %v598 = vld [vmem:[#allocation14 + $0x10] sm:$0xff]
    %v599 = vld [vmem:[#allocation14 + $0x18] sm:$0xff]
    %v600 = vadd.f32 %v143, %v543
    %v601 = vadd.f32 %v144, %v591
    %v602 = vsel %vm216, %v600, 0.0
    %603 = vadd.xlane.f32.xlu0 %v602
    %v604 = vpop.xlane.xlu0 %603
    %v605 = vsel %vm216, %v601, 0.0
    %606 = vadd.xlane.f32.xlu0 %v605
    %v607 = vpop.xlane.xlu0 %606
    %v608 = vrot.slane %v604, 4
    %v609 = vadd.f32 %v604, %v608
    %v610 = vrot.slane %v609, 2
    %v611 = vadd.f32 %v609, %v610
    %v612 = vrot.slane %v611, 1
    %v613 = vadd.f32 %v611, %v612
    %v614 = vrot.slane %v607, 4
    %v615 = vadd.f32 %v607, %v614
    %v616 = vrot.slane %v615, 2
    %v617 = vadd.f32 %v615, %v616
    %v618 = vrot.slane %v617, 1
    %v619 = vadd.f32 %v617, %v618
    %v620 = vmul.f32 %v600, %v600
    %v621 = vmul.f32 %v601, %v601
    %v622 = vsel %vm216, %v620, 0.0
    %623 = vadd.xlane.f32.xlu0 %v622
    %v624 = vpop.xlane.xlu0 %623
    %v625 = vsel %vm216, %v621, 0.0
    %626 = vadd.xlane.f32.xlu0 %v625
    %v627 = vpop.xlane.xlu0 %626
    %v628 = vrot.slane %v624, 4
    %v629 = vadd.f32 %v624, %v628
    %v630 = vrot.slane %v629, 2
    %v631 = vadd.f32 %v629, %v630
    %v632 = vrot.slane %v631, 1
    %v633 = vadd.f32 %v631, %v632
    %v634 = vrot.slane %v627, 4
    %v635 = vadd.f32 %v627, %v634
    %v636 = vrot.slane %v635, 2
    %v637 = vadd.f32 %v635, %v636
    %v638 = vrot.slane %v637, 1
    %v639 = vadd.f32 %v637, %v638
    %v640 = vmul.f32 %v613, 0.00390625
    %v641 = vmul.f32 %v619, 0.00390625
    %v642 = vmul.f32 %v633, 0.00390625
    %v643 = vmul.f32 %v639, 0.00390625
    %v644 = vmul.f32 %v640, %v640
    %v645 = vmul.f32 %v641, %v641
    %v646 = vsub.f32 %v642, %v644
    %v647 = vsub.f32 %v643, %v645
    %v648 = vsub.f32 %v600, %v640
    %v649 = vsub.f32 %v601, %v641
    %v650 = vadd.f32 %v646, 1e-05
    %v651 = vadd.f32 %v647, 1e-05
    %v652 = vrsqrt.pop %v650
    %v653 = vrsqrt.pop %v651
    %v654 = vmul.f32 %v648, %v652
    %v655 = vmul.f32 %v649, %v653
    %v656 = vmul.f32 %v654, %v596
    %v657 = vmul.f32 %v655, %v596
    %v658 = vadd.f32 %v656, %v597
    %v659 = vadd.f32 %v657, %v597
    %v660 = vld [vmem:[#allocation13] sm:$0x1]
    %v661 = vpack.c.bf16 %v659, %v658
    %v662 = vld [vmem:[#allocation10] sm:$0xf]
    %v663 = vld [vmem:[#allocation10 + $0x4] sm:$0xf]
    %v664 = vld [vmem:[#allocation10 + $0x8] sm:$0xf]
    %v665 = vld [vmem:[#allocation10 + $0xc] sm:$0xf]
    %v667 = vlaneseq
    %v668 = vshrl.u32 %v667, 7
    %v669 = vsub.s32 0, %v668
    %v670 = vrot.slane %v660, %v669
    %v676 = vunpack.c.l.b16 %v662
    %v677 = vunpack.c.l.b16 %v663
    %v678 = vunpack.c.l.b16 %v664
    %v679 = vunpack.c.l.b16 %v665
    %v680 = vpack.c.b16 %v677, %v676
    %v681 = vpack.c.b16 %v679, %v678
    %v685 = vsel %vm216, %v661, 0
    %687 = vmatprep.subr.bf16.mxu0 0
    %688 = vmatpush1.bf16.msra.mxu0 %v680
    %689 = vmatprep.subr.bf16.mxu0 0
    %690 = vmatpush1.bf16.msra.mxu0 %v681
    %691 = vmatprep.subr.bf16.mxu0 0
    %692 = vmatpush1.bf16.msra.mxu0 0
    %693 = vmatprep.subr.bf16.mxu0 0
    %694 = vmatpush1.bf16.msra.mxu0 0
    %695 = vmatprep.subr.bf16.mxu0 0
    %696 = vmatpush1.bf16.msra.mxu0 0
    %697 = vmatprep.subr.bf16.mxu0 0
    %698 = vmatpush1.bf16.msra.mxu0 0
    %699 = vmatprep.subr.bf16.mxu0 0
    %700 = vmatpush1.bf16.msra.mxu0 0
    %701 = vmatprep.subr.bf16.mxu0 0
    %702 = vmatpush1.bf16.msra.mxu0 0
    %703 = vmatprep.subr.bf16.mxu0 0
    %704 = vmatpush1.bf16.msra.mxu0 0
    %705 = vmatprep.subr.bf16.mxu0 0
    %706 = vmatpush1.bf16.msra.mxu0 0
    %707 = vmatprep.subr.bf16.mxu0 0
    %708 = vmatpush1.bf16.msra.mxu0 0
    %709 = vmatprep.subr.bf16.mxu0 0
    %710 = vmatpush1.bf16.msra.mxu0 0
    %711 = vmatprep.subr.bf16.mxu0 0
    %712 = vmatpush1.bf16.msra.mxu0 0
    %713 = vmatprep.subr.bf16.mxu0 0
    %714 = vmatpush1.bf16.msra.mxu0 0
    %715 = vmatprep.subr.bf16.mxu0 0
    %716 = vmatpush1.bf16.msra.mxu0 0
    %717 = vmatprep.subr.bf16.mxu0 0
    %718 = vmatpush1.bf16.msra.mxu0 0
    %719 = vmatprep.mubr.bf16.mxu0 0
    %720 = vmatmul.mubr.bf16.gmra.mrb[0].mxu0 %v685
    %v721 = vpop.f32.mrb[0].mxu0
    %v722 = vadd.f32 %v670, %v721
    %v723 = vpop.f32.mrb[0].mxu0
    %v724 = vpop.f32.mrb[0].mxu0
    %v725 = vadd.f32 %v670, %v724
    %v726 = vpop.f32.mrb[0].mxu0
    %727 = vdwg.mxu0
    %v728 = vmax.f32 %v722, 0.0
    %v729 = vmax.f32 %v725, 0.0
    %v730 = vpack.c.bf16 %v729, %v728
    %v731 = vld [vmem:[#allocation11] sm:$0xf]
    %v732 = vld [vmem:[#allocation11 + $0x4] sm:$0xf]
    %v733 = vld [vmem:[#allocation11 + $0x8] sm:$0xf]
    %v737 = vunpack.c.l.b16 %v731
    %v738 = vunpack.c.l.b16 %v732
    %v739 = vunpack.c.l.b16 %v733
    %v740 = vpack.c.b16 %v738, %v737
    %v741 = vpack.c.b16 %v739, %v739
    %743 = vrot.lane.b32.xlu0 %v670, 104
    %v744 = vpop.permute.xlu0 %743
    %v747 = vsel %vm486, %v730, 0
    %v750 = vsel %vm504, %v741, 0
    %752 = vmatprep.subr.bf16.mxu0 0
    %753 = vmatpush1.bf16.msra.mxu0 %v740
    %754 = vmatprep.subr.bf16.mxu0 0
    %755 = vmatpush1.bf16.msra.mxu0 %v750
    %756 = vmatprep.subr.bf16.mxu0 0
    %757 = vmatpush1.bf16.msra.mxu0 0
    %758 = vmatprep.subr.bf16.mxu0 0
    %759 = vmatpush1.bf16.msra.mxu0 0
    %760 = vmatprep.subr.bf16.mxu0 0
    %761 = vmatpush1.bf16.msra.mxu0 0
    %762 = vmatprep.subr.bf16.mxu0 0
    %763 = vmatpush1.bf16.msra.mxu0 0
    %764 = vmatprep.subr.bf16.mxu0 0
    %765 = vmatpush1.bf16.msra.mxu0 0
    %766 = vmatprep.subr.bf16.mxu0 0
    %767 = vmatpush1.bf16.msra.mxu0 0
    %768 = vmatprep.subr.bf16.mxu0 0
    %769 = vmatpush1.bf16.msra.mxu0 0
    %770 = vmatprep.subr.bf16.mxu0 0
    %771 = vmatpush1.bf16.msra.mxu0 0
    %772 = vmatprep.subr.bf16.mxu0 0
    %773 = vmatpush1.bf16.msra.mxu0 0
    %774 = vmatprep.subr.bf16.mxu0 0
    %775 = vmatpush1.bf16.msra.mxu0 0
    %776 = vmatprep.subr.bf16.mxu0 0
    %777 = vmatpush1.bf16.msra.mxu0 0
    %778 = vmatprep.subr.bf16.mxu0 0
    %779 = vmatpush1.bf16.msra.mxu0 0
    %780 = vmatprep.subr.bf16.mxu0 0
    %781 = vmatpush1.bf16.msra.mxu0 0
    %782 = vmatprep.subr.bf16.mxu0 0
    %783 = vmatpush1.bf16.msra.mxu0 0
    %784 = vmatprep.mubr.bf16.mxu0 0
    %785 = vmatmul.mubr.bf16.gmra.mrb[0].mxu0 %v747
    %v786 = vpop.f32.mrb[0].mxu0
    %v787 = vadd.f32 %v744, %v786
    %v788 = vpop.f32.mrb[0].mxu0
    %v789 = vpop.f32.mrb[0].mxu0
    %v790 = vadd.f32 %v744, %v789
    %v791 = vpop.f32.mrb[0].mxu0
    %792 = vdwg.mxu0
    %v793 = vadd.f32 %v658, %v787
    %v794 = vadd.f32 %v659, %v790
    %v795 = vsel %vm216, %v793, 0.0
    %796 = vadd.xlane.f32.xlu0 %v795
    %v797 = vpop.xlane.xlu0 %796
    %v798 = vsel %vm216, %v794, 0.0
    %799 = vadd.xlane.f32.xlu0 %v798
    %v800 = vpop.xlane.xlu0 %799
    %v801 = vrot.slane %v797, 4
    %v802 = vadd.f32 %v797, %v801
    %v803 = vrot.slane %v802, 2
    %v804 = vadd.f32 %v802, %v803
    %v805 = vrot.slane %v804, 1
    %v806 = vadd.f32 %v804, %v805
    %v807 = vrot.slane %v800, 4
    %v808 = vadd.f32 %v800, %v807
    %v809 = vrot.slane %v808, 2
    %v810 = vadd.f32 %v808, %v809
    %v811 = vrot.slane %v810, 1
    %v812 = vadd.f32 %v810, %v811
    %v813 = vmul.f32 %v793, %v793
    %v814 = vmul.f32 %v794, %v794
    %v815 = vsel %vm216, %v813, 0.0
    %816 = vadd.xlane.f32.xlu0 %v815
    %v817 = vpop.xlane.xlu0 %816
    %v818 = vsel %vm216, %v814, 0.0
    %819 = vadd.xlane.f32.xlu0 %v818
    %v820 = vpop.xlane.xlu0 %819
    %v821 = vrot.slane %v817, 4
    %v822 = vadd.f32 %v817, %v821
    %v823 = vrot.slane %v822, 2
    %v824 = vadd.f32 %v822, %v823
    %v825 = vrot.slane %v824, 1
    %v826 = vadd.f32 %v824, %v825
    %v827 = vrot.slane %v820, 4
    %v828 = vadd.f32 %v820, %v827
    %v829 = vrot.slane %v828, 2
    %v830 = vadd.f32 %v828, %v829
    %v831 = vrot.slane %v830, 1
    %v832 = vadd.f32 %v830, %v831
    %v833 = vmul.f32 %v806, 0.00390625
    %v834 = vmul.f32 %v812, 0.00390625
    %v835 = vmul.f32 %v826, 0.00390625
    %v836 = vmul.f32 %v832, 0.00390625
    %v837 = vmul.f32 %v833, %v833
    %v838 = vmul.f32 %v834, %v834
    %v839 = vsub.f32 %v835, %v837
    %v840 = vsub.f32 %v836, %v838
    %v841 = vsub.f32 %v793, %v833
    %v842 = vsub.f32 %v794, %v834
    %v843 = vadd.f32 %v839, 1e-05
    %v844 = vadd.f32 %v840, 1e-05
    %v845 = vrsqrt.pop %v843
    %v846 = vrsqrt.pop %v844
    %v847 = vmul.f32 %v841, %v845
    %v848 = vmul.f32 %v842, %v846
    %v849 = vmul.f32 %v847, %v598
    %v850 = vmul.f32 %v848, %v598
    %v851 = vadd.f32 %v849, %v599
    %v852 = vadd.f32 %v850, %v599
    %v853 = vcombine.high %v851, 0.0
    %v855 = vunpack.c.l.s4 1983009808
    %v856 = vunpack.c.0.s8 %v855
    %v857 = vlaneseq
    %v858 = vshrl.u32 %v857, 7
    %v859 = vsub.s32 %v856, %v858
    %v860 = vrot.slane %v851, %v859
    %v862 = vunpack.c.l.s4 1983009808
    %v863 = vunpack.c.0.s8 %v862
    %v864 = vlaneseq
    %v865 = vshrl.u32 %v864, 7
    %v866 = vsub.s32 %v863, %v865
    %v867 = vrot.slane %v853, %v866
    %v868 = vcombine.high %v852, 0.0
    %v870 = vunpack.c.l.s4 1983009808
    %v871 = vunpack.c.0.s8 %v870
    %v872 = vlaneseq
    %v873 = vshrl.u32 %v872, 7
    %v874 = vsub.s32 %v871, %v873
    %v875 = vrot.slane %v852, %v874
    %v877 = vunpack.c.l.s4 1983009808
    %v878 = vunpack.c.0.s8 %v877
    %v879 = vlaneseq
    %v880 = vshrl.u32 %v879, 7
    %v881 = vsub.s32 %v878, %v880
    %v882 = vrot.slane %v868, %v881
    %v883 = vcombine.low %v860, %v875
    %v884 = vcombine.high %v860, %v875
    %v886 = vunpack.c.l.s4 1934713408
    %v887 = vunpack.c.0.s8 %v886
    %v888 = vlaneseq
    %v889 = vshrl.u32 %v888, 7
    %v890 = vsub.s32 %v887, %v889
    %v891 = vrot.slane %v883, %v890
    %v893 = vunpack.c.l.s4 1934713408
    %v894 = vunpack.c.0.s8 %v893
    %v895 = vlaneseq
    %v896 = vshrl.u32 %v895, 7
    %v897 = vsub.s32 %v894, %v896
    %v898 = vrot.slane %v884, %v897
    %v899 = vcombine.low %v867, %v882
    %v900 = vcombine.high %v867, %v882
    %v902 = vunpack.c.l.s4 1934713408
    %v903 = vunpack.c.0.s8 %v902
    %v904 = vlaneseq
    %v905 = vshrl.u32 %v904, 7
    %v906 = vsub.s32 %v903, %v905
    %v907 = vrot.slane %v899, %v906
    %v909 = vunpack.c.l.s4 1934713408
    %v910 = vunpack.c.0.s8 %v909
    %v911 = vlaneseq
    %v912 = vshrl.u32 %v911, 7
    %v913 = vsub.s32 %v910, %v912
    %v914 = vrot.slane %v900, %v913
    %v915 = vcombine.high %v891, 0.0
    %v916 = vcombine.high %v898, 0.0
    %v917 = vcombine.high %v907, 0.0
    %v918 = vcombine.high %v914, 0.0
    %920 = vrot.lane.b32.xlu0 %v915, 32
    %v921 = vpop.permute.xlu0 %920
    %924 = vrot.lane.b32.xlu0 %v898, 64
    %v925 = vpop.permute.xlu0 %924
    %928 = vrot.lane.b32.xlu0 %v916, 96
    %v929 = vpop.permute.xlu0 %928
    %932 = vrot.lane.b32.xlu0 %v917, 32
    %v933 = vpop.permute.xlu0 %932
    %936 = vrot.lane.b32.xlu0 %v914, 64
    %v937 = vpop.permute.xlu0 %936
    %940 = vrot.lane.b32.xlu0 %v918, 96
    %v941 = vpop.permute.xlu0 %940
    %v943 = vsel %vm216, %v891, %v921
    %vm944 = vcmask 523264
    %v945 = vsel %vm944, %v943, %v925
    %vm946 = vcmask 785408
    %v947 = vsel %vm946, %v945, %v929
    %v948 = vsel %vm216, %v907, %v933
    %v949 = vsel %vm944, %v948, %v937
    %v950 = vsel %vm946, %v949, %v941
    %v953 = vcombine.low %v947, %v950
    %v955 = vunpack.c.l.s4 1983009808
    %v956 = vunpack.c.0.s8 %v955
    %v957 = vlaneseq
    %v958 = vshrl.u32 %v957, 7
    %v959 = vsub.s32 %v956, %v958
    %v960 = vrot.slane %v953, %v959
    %962 = vst [vmem:[#allocation16] sm:$0xf] %v960
    // Predicated region
    $region66: #{tpu_custom_call.1} parent=1 // pred_check
      _
    $region67: #{tpu_custom_call.1} parent=1 // pred_check_branch
      %964 = sbr.rel (0) target = $region69
    $region68: #{tpu_custom_call.1} parent=1 // pred_region
      %s966 = ssub.s32 64, 64
      %967 = vsyncadd [#allocation4], %s966
      %s969 = sshll.u32 [#allocation16], 4
      %s970 = int_to_ptr.vmem [resolvable:$true] %s969
      %972 = dma.vmem_to_hbm [thread:$0]  %s970, 64, %s8, [#allocation4]
    $region69: #{tpu_custom_call.1} parent=1 // pred_fallthru
      _
    // Predicated region
    $region70: #{tpu_custom_call.1} parent=1 // pred_check
      _
    $region71: #{tpu_custom_call.1} parent=1 // pred_check_branch
      %974 = sbr.rel (0) target = $region73
    $region72: #{tpu_custom_call.1} parent=1 // pred_region
      %s976 = ssub.s32 32, 32
      %977 = vsyncadd [#allocation18], %s976
      %s979 = sshll.u32 [#allocation17], 4
      %s980 = int_to_ptr.vmem [resolvable:$true] %s979
      %982 = dma.vmem_to_hbm [thread:$0]  %s980, 32, %s9, [#allocation18]
    $region73: #{tpu_custom_call.1} parent=1 // pred_fallthru
      _
    // Predicated region
    $region74: #{tpu_custom_call.1} parent=1 // pred_check
      _
    $region75: #{tpu_custom_call.1} parent=1 // pred_check_branch
      %984 = sbr.rel (0) target = $region77
    $region76: #{tpu_custom_call.1} parent=1 // pred_region
      %985 = dma.done [#allocation4], 64
    $region77: #{tpu_custom_call.1} parent=1 // pred_fallthru
      _
    // Predicated region
    $region78: #{tpu_custom_call.1} parent=1 // pred_check
      _
    $region79: #{tpu_custom_call.1} parent=1 // pred_check_branch
      %987 = sbr.rel (0) target = $region81
    $region80: #{tpu_custom_call.1} parent=1 // pred_region
      %988 = dma.done [#allocation18], 32
    $region81: #{tpu_custom_call.1} parent=1 // pred_fallthru
      _
    %989 = vsyncpa [#allocation3], 1
    %990 = vsyncpa [#allocation6], 1
    %991 = vsyncpa [#allocation9], 1
    %992 = vsyncpa [#allocation12], 1
    %993 = vsyncpa [#allocation15], 1
    %994 = vsyncpa [#allocation4], 1
    %995 = vsyncpa [#allocation18], 1

</llo_original>
